<compile_context>
chip_gen: v6e
topology: v6e:2x2x1
jax: 0.10.0
libtpu: 0.0.40
codegen_flags: <defaults>
</compile_context>

<pallas_src>
import jax
import jax.numpy as jnp
from jax.experimental import pallas as pl
from jax.experimental.pallas import tpu as pltpu


def _cdiv(a, b):
    return -(-a // b)


def _round_up(a, b):
    return _cdiv(a, b) * b


def _make_kernel(S, TR, num_tiles, needs_mask, smooth):
    """Per-(sample, spatial-tile) kernel. All args are static Python values."""

    def kernel(logits_ref, targets_ref, score_ref, acc_ref):
        # logits_ref : (1, C, TR, 128) VMEM tile (any float dtype)
        # targets_ref: (1, TR, 128)     VMEM tile (float or integer mask)
        # score_ref  : (1, 8, 128)      lane-dense per-sample output
        # acc_ref    : (3, 8, 128) f32  [intersection, m1_sum, m2_sum] partials
        j = pl.program_id(1)

        @pl.when(j == 0)
        def _init():
            acc_ref[...] = jnp.zeros(acc_ref.shape, acc_ref.dtype)

        C = logits_ref.shape[1]
        if C == 2:
            # softmax(logits, channel)[1] == sigmoid(l1 - l0)
            l0 = logits_ref[0, 0].astype(jnp.float32)           # (TR, 128)
            l1 = logits_ref[0, 1].astype(jnp.float32)           # (TR, 128)
            probs1 = jax.nn.sigmoid(l1 - l0)                    # (TR, 128)
        else:
            lg = logits_ref[0].astype(jnp.float32)              # (C, TR, 128)
            m = jnp.max(lg, axis=0)                             # elementwise over C
            e = jnp.exp(lg - m[None])
            denom = jnp.sum(e, axis=0)                          # >= 1
            probs1 = e[1] * pl.reciprocal(denom, approx=True)   # (TR, 128)

        tgt = targets_ref[0]
        if not jnp.issubdtype(tgt.dtype, jnp.floating):
            tgt = tgt.astype(jnp.int32)
        tgt = tgt.astype(jnp.float32)                           # (TR, 128)

        def fold(x):
            # (TR,128) -> (8,128): pure VPU adds, stays inside (8,128) tiles.
            if TR == 8:
                return x
            return jnp.sum(x.reshape(TR // 8, 8, 128), axis=0)

        def accumulate(p, t):
            acc_ref[0] += fold(p * t)   # intersection
            acc_ref[1] += fold(p)       # m1 sum
            acc_ref[2] += fold(t)       # m2 sum

        if needs_mask:
            last = num_tiles - 1

            @pl.when(j < last)
            def _hot():                 # mask-free hot path
                accumulate(probs1, tgt)

            @pl.when(j == last)
            def _tail():                # only the last tile can contain OOB / pad
                rows = jax.lax.broadcasted_iota(jnp.int32, (TR, 128), 0)
                lanes = jax.lax.broadcasted_iota(jnp.int32, (TR, 128), 1)
                # NOTE: int32 flat index; fine for S < 2**31.
                flat = last * TR * 128 + rows * 128 + lanes
                valid = flat < S
                accumulate(jnp.where(valid, probs1, 0.0),
                           jnp.where(valid, tgt, 0.0))
        else:
            accumulate(probs1, tgt)

        @pl.when(j == num_tiles - 1)
        def _finalize():
            inter = jnp.sum(acc_ref[0])
            m1s = jnp.sum(acc_ref[1])
            m2s = jnp.sum(acc_ref[2])
            score = 2.0 * (inter + smooth) / (m1s + m2s + smooth)
            score_ref[...] = jnp.full(score_ref.shape, score, score_ref.dtype)

    return kernel


def soft_dice_loss(logits, targets, *, rows_per_tile=None, smooth=1.0,
                   vmem_budget_bytes=24 * 1024 * 1024):
    """logits: (N, C, H, W) (f32 or bf16); targets: (N, H, W) binary mask
    (uint8/int/bf16/f32 all accepted). Returns the scalar SoftDiceLoss.

    rows_per_tile: spatial tile height in 128-lane rows (multiple of 32).
    Default auto-sizes from a conservative double-buffer VMEM budget that is
    safe on v5e / v6e / v7x and scales ~1/C for large channel counts.
    """
    N, C, H, W = logits.shape
    assert C >= 2, "SoftDiceLoss selects softmax channel 1; needs C >= 2"

    S = H * W
    R = _cdiv(S, 128)

    lbytes = jnp.dtype(logits.dtype).itemsize
    tbytes = jnp.dtype(targets.dtype).itemsize

    if rows_per_tile is None:
        # Double-buffered input blocks dominate VMEM: 2*TR*128*(C*lb + tb).
        per_row = 128 * (C * lbytes + tbytes)
        tr = vmem_budget_bytes // (2 * per_row)
        rows_per_tile = max(32, min(4096, (tr // 32) * 32))
    assert rows_per_tile % 32 == 0

    TR = min(rows_per_tile, _round_up(R, 32))
    num_tiles = _cdiv(R, TR)
    needs_mask = (num_tiles * TR * 128) != S

    logits_r = logits.reshape(N, C, S)
    targets_r = targets.reshape(N, S)
    if S % 128 != 0:
        # TODO(synk): ragged (<128-element) spatial tail still needs a pad copy;
        # the in-kernel mask (flat < S) zeroes these padded positions.
        pad = R * 128 - S
        logits_r = jnp.pad(logits_r, ((0, 0), (0, 0), (0, pad)))
        targets_r = jnp.pad(targets_r, ((0, 0), (0, pad)))
    logits_r = logits_r.reshape(N, C, R, 128)     # zero-copy when S % 128 == 0
    targets_r = targets_r.reshape(N, R, 128)

    kernel = _make_kernel(S=S, TR=TR, num_tiles=num_tiles,
                          needs_mask=needs_mask, smooth=float(smooth))

    in_bytes = 2 * TR * 128 * (C * lbytes + tbytes)   # double-buffered inputs
    vmem_limit = int(min(max(2 * in_bytes + (4 << 20), 16 << 20), 48 << 20))

    scores = pl.pallas_call(
        kernel,
        out_shape=jax.ShapeDtypeStruct((N, 8, 128), jnp.float32),
        grid=(N, num_tiles),
        in_specs=[
            pl.BlockSpec((1, C, TR, 128), lambda i, j: (i, 0, j, 0)),
            pl.BlockSpec((1, TR, 128), lambda i, j: (i, j, 0)),
        ],
        out_specs=pl.BlockSpec((1, 8, 128), lambda i, j: (i, 0, 0)),
        scratch_shapes=[pltpu.VMEM((3, 8, 128), jnp.float32)],
        compiler_params=pltpu.CompilerParams(
            dimension_semantics=("parallel", "arbitrary"),
            vmem_limit_bytes=vmem_limit),
    )(logits_r, targets_r)

    per_sample_score = scores[:, 0, 0]                # (N,)
    return 1.0 - jnp.sum(per_sample_score) / N


def _reference(logits, targets, smooth=1.0):
    """Pure-JAX reference matching the PyTorch forward()."""
    N = logits.shape[0]
    probs = jax.nn.softmax(logits.astype(jnp.float32), axis=1)[:, 1, :, :]
    m1 = probs.reshape(N, -1)
    m2 = targets.reshape(N, -1).astype(jnp.float32)
    inter = jnp.sum(m1 * m2, axis=1)
    score = 2.0 * (inter + smooth) / (jnp.sum(m1, axis=1) + jnp.sum(m2, axis=1) + smooth)
    return 1.0 - jnp.sum(score) / N


if __name__ == "__main__":
    key = jax.random.PRNGKey(0)
    k1, k2, k3, k4, k5, k6, k7, k8 = jax.random.split(key, 8)

    # --- Test A: small shape, C=2 sigmoid fast path, uint8 targets ----------
    N, C, H, W = 2, 2, 16, 16
    logits = jax.random.normal(k1, (N, C, H, W), dtype=jnp.float32)
    targets = (jax.random.uniform(k2, (N, H, W)) > 0.5).astype(jnp.uint8)
    loss = jax.block_until_ready(soft_dice_loss(logits, targets))
    ref = _reference(logits, targets)
    assert jnp.allclose(loss, ref, atol=1e-5, rtol=1e-5), (loss, ref)

    # --- Test B: multi-tile grid + partial last block masking, bf16 targets -
    N, C, H, W = 2, 2, 80, 80          # S=6400 -> R=50 -> tiles of 32 rows
    logits = jax.random.normal(k3, (N, C, H, W), dtype=jnp.float32)
    targets = (jax.random.uniform(k4, (N, H, W)) > 0.5).astype(jnp.bfloat16)
    loss = jax.block_until_ready(soft_dice_loss(logits, targets, rows_per_tile=32))
    ref = _reference(logits, targets)
    assert jnp.allclose(loss, ref, atol=1e-5, rtol=1e-5), (loss, ref)

    # --- Test C: general-C softmax path (approx reciprocal -> looser tol) ---
    N, C, H, W = 2, 3, 16, 16
    logits = jax.random.normal(k5, (N, C, H, W), dtype=jnp.float32)
    targets = (jax.random.uniform(k6, (N, H, W)) > 0.5).astype(jnp.uint8)
    loss = jax.block_until_ready(soft_dice_loss(logits, targets))
    ref = _reference(logits, targets)
    assert jnp.allclose(loss, ref, atol=3e-3, rtol=3e-3), (loss, ref)

    # --- Test D: bf16 logits (bandwidth path), mask-free exact tiling -------
    N, C, H, W = 2, 2, 64, 64          # S=4096 -> R=32 == TR -> no mask
    logits = jax.random.normal(k7, (N, C, H, W), dtype=jnp.float32).astype(jnp.bfloat16)
    targets = (jax.random.uniform(k8, (N, H, W)) > 0.5).astype(jnp.uint8)
    loss = jax.block_until_ready(soft_dice_loss(logits, targets))
    ref = _reference(logits, targets)
    assert jnp.allclose(loss, ref, atol=1e-5, rtol=1e-5), (loss, ref)

    print("KERNEL_OK")
</pallas_src>

<mosaic_0001>
module attributes {stable_mosaic.version = 11 : i64} {
  func.func @kernel(%arg0: i32, %arg1: i32, %arg2: memref<1x2x32x128xf32, #tpu.memory_space<vmem>>, %arg3: memref<1x32x128xi8, #tpu.memory_space<vmem>>, %arg4: memref<1x8x128xf32, #tpu.memory_space<vmem>>, %arg5: memref<3x8x128xf32, #tpu.memory_space<vmem>>) attributes {dimension_semantics = [#tpu.dimension_semantics<parallel>, #tpu.dimension_semantics<arbitrary>], iteration_bounds = array<i64: 2, 1>, scalar_prefetch = 0 : i64, scratch_operands = 1 : i64, tpu.core_type = #tpu.core_type<tc>, window_params = [{transform_indices = @transform_0, window_bounds = array<i64: 1, 2, 32, 128>}, {transform_indices = @transform_1, window_bounds = array<i64: 1, 32, 128>}, {transform_indices = @transform_2, window_bounds = array<i64: 1, 8, 128>}]} {
    %c0_i32 = arith.constant 0 : i32
    %0 = arith.cmpi eq, %arg1, %c0_i32 : i32
    %1 = arith.extui %0 : i1 to i32
    %c0_i32_0 = arith.constant 0 : i32
    %2 = arith.cmpi ne, %1, %c0_i32_0 : i32
    scf.if %2 {
      %cst_16 = arith.constant 0.000000e+00 : f32
      %26 = vector.broadcast %cst_16 : f32 to vector<3x8x128xf32>
      %c0_17 = arith.constant 0 : index
      %c0_18 = arith.constant 0 : index
      %c0_19 = arith.constant 0 : index
      %27 = vector.load %arg5[%c0_17, %c0_18, %c0_19] : memref<3x8x128xf32, #tpu.memory_space<vmem>>, vector<3x8x128xf32>
      tpu.vector_store %arg5[%c0_17, %c0_18, %c0_19], %26 {strides = array<i32>} : memref<3x8x128xf32, #tpu.memory_space<vmem>>, vector<3x8x128xf32>,
    } else {
    }
    %c0 = arith.constant 0 : index
    %c0_1 = arith.constant 0 : index
    %c0_2 = arith.constant 0 : index
    %c0_3 = arith.constant 0 : index
    %3 = vector.load %arg2[%c0, %c0_1, %c0_2, %c0_3] : memref<1x2x32x128xf32, #tpu.memory_space<vmem>>, vector<1x1x32x128xf32>
    %4 = vector.shape_cast %3 : vector<1x1x32x128xf32> to vector<32x128xf32>
    %c0_4 = arith.constant 0 : index
    %c1 = arith.constant 1 : index
    %c0_5 = arith.constant 0 : index
    %c0_6 = arith.constant 0 : index
    %5 = vector.load %arg2[%c0_4, %c1, %c0_5, %c0_6] : memref<1x2x32x128xf32, #tpu.memory_space<vmem>>, vector<1x1x32x128xf32>
    %6 = vector.shape_cast %5 : vector<1x1x32x128xf32> to vector<32x128xf32>
    %7 = arith.subf %6, %4 : vector<32x128xf32>
    %8 = arith.negf %7 : vector<32x128xf32>
    %9 = math.exp %8 : vector<32x128xf32>
    %cst = arith.constant 1.000000e+00 : f32
    %10 = vector.broadcast %cst : f32 to vector<32x128xf32>
    %11 = arith.addf %10, %9 : vector<32x128xf32>
    %12 = arith.divf %10, %11 : vector<32x128xf32>
    %c0_7 = arith.constant 0 : index
    %c0_8 = arith.constant 0 : index
    %c0_9 = arith.constant 0 : index
    %13 = vector.load %arg3[%c0_7, %c0_8, %c0_9] : memref<1x32x128xi8, #tpu.memory_space<vmem>>, vector<1x32x128xi8>
    %14 = vector.shape_cast %13 : vector<1x32x128xi8> to vector<32x128xi8>
    %15 = arith.extui %14 : vector<32x128xi8> to vector<32x128xi32>
    %16 = arith.sitofp %15 : vector<32x128xi32> to vector<32x128xf32>
    %c0_i32_10 = arith.constant 0 : i32
    %17 = arith.cmpi slt, %arg1, %c0_i32_10 : i32
    %18 = arith.extui %17 : i1 to i32
    %c0_i32_11 = arith.constant 0 : i32
    %19 = arith.cmpi ne, %18, %c0_i32_11 : i32
    scf.if %19 {
      %c0_16 = arith.constant 0 : index
      %c0_17 = arith.constant 0 : index
      %c0_18 = arith.constant 0 : index
      %26 = vector.load %arg5[%c0_16, %c0_17, %c0_18] : memref<3x8x128xf32, #tpu.memory_space<vmem>>, vector<1x8x128xf32>
      %27 = vector.shape_cast %26 : vector<1x8x128xf32> to vector<8x128xf32>
      %28 = arith.mulf %12, %16 : vector<32x128xf32>
      %29 = vector.shape_cast %28 : vector<32x128xf32> to vector<4x8x128xf32>
      %cst_19 = arith.constant dense<0.000000e+00> : vector<8x128xf32>
      %30 = vector.multi_reduction <add>, %29, %cst_19 [0] : vector<4x8x128xf32> to vector<8x128xf32>
      %31 = arith.addf %27, %30 : vector<8x128xf32>
      %c0_20 = arith.constant 0 : index
      %c0_21 = arith.constant 0 : index
      %c0_22 = arith.constant 0 : index
      %32 = vector.load %arg5[%c0_20, %c0_21, %c0_22] : memref<3x8x128xf32, #tpu.memory_space<vmem>>, vector<1x8x128xf32>
      %33 = vector.shape_cast %32 : vector<1x8x128xf32> to vector<8x128xf32>
      %34 = vector.shape_cast %31 : vector<8x128xf32> to vector<1x8x128xf32>
      tpu.vector_store %arg5[%c0_20, %c0_21, %c0_22], %34 {strides = array<i32>} : memref<3x8x128xf32, #tpu.memory_space<vmem>>, vector<1x8x128xf32>,
      %c1_23 = arith.constant 1 : index
      %c0_24 = arith.constant 0 : index
      %c0_25 = arith.constant 0 : index
      %35 = vector.load %arg5[%c1_23, %c0_24, %c0_25] : memref<3x8x128xf32, #tpu.memory_space<vmem>>, vector<1x8x128xf32>
      %36 = vector.shape_cast %35 : vector<1x8x128xf32> to vector<8x128xf32>
      %37 = vector.shape_cast %12 : vector<32x128xf32> to vector<4x8x128xf32>
      %cst_26 = arith.constant dense<0.000000e+00> : vector<8x128xf32>
      %38 = vector.multi_reduction <add>, %37, %cst_26 [0] : vector<4x8x128xf32> to vector<8x128xf32>
      %39 = arith.addf %36, %38 : vector<8x128xf32>
      %c1_27 = arith.constant 1 : index
      %c0_28 = arith.constant 0 : index
      %c0_29 = arith.constant 0 : index
      %40 = vector.load %arg5[%c1_27, %c0_28, %c0_29] : memref<3x8x128xf32, #tpu.memory_space<vmem>>, vector<1x8x128xf32>
      %41 = vector.shape_cast %40 : vector<1x8x128xf32> to vector<8x128xf32>
      %42 = vector.shape_cast %39 : vector<8x128xf32> to vector<1x8x128xf32>
      tpu.vector_store %arg5[%c1_27, %c0_28, %c0_29], %42 {strides = array<i32>} : memref<3x8x128xf32, #tpu.memory_space<vmem>>, vector<1x8x128xf32>,
      %c2 = arith.constant 2 : index
      %c0_30 = arith.constant 0 : index
      %c0_31 = arith.constant 0 : index
      %43 = vector.load %arg5[%c2, %c0_30, %c0_31] : memref<3x8x128xf32, #tpu.memory_space<vmem>>, vector<1x8x128xf32>
      %44 = vector.shape_cast %43 : vector<1x8x128xf32> to vector<8x128xf32>
      %45 = vector.shape_cast %16 : vector<32x128xf32> to vector<4x8x128xf32>
      %cst_32 = arith.constant dense<0.000000e+00> : vector<8x128xf32>
      %46 = vector.multi_reduction <add>, %45, %cst_32 [0] : vector<4x8x128xf32> to vector<8x128xf32>
      %47 = arith.addf %44, %46 : vector<8x128xf32>
      %c2_33 = arith.constant 2 : index
      %c0_34 = arith.constant 0 : index
      %c0_35 = arith.constant 0 : index
      %48 = vector.load %arg5[%c2_33, %c0_34, %c0_35] : memref<3x8x128xf32, #tpu.memory_space<vmem>>, vector<1x8x128xf32>
      %49 = vector.shape_cast %48 : vector<1x8x128xf32> to vector<8x128xf32>
      %50 = vector.shape_cast %47 : vector<8x128xf32> to vector<1x8x128xf32>
      tpu.vector_store %arg5[%c2_33, %c0_34, %c0_35], %50 {strides = array<i32>} : memref<3x8x128xf32, #tpu.memory_space<vmem>>, vector<1x8x128xf32>,
    } else {
    }
    %c0_i32_12 = arith.constant 0 : i32
    %20 = arith.cmpi eq, %arg1, %c0_i32_12 : i32
    %21 = arith.extui %20 : i1 to i32
    %c0_i32_13 = arith.constant 0 : i32
    %22 = arith.cmpi ne, %21, %c0_i32_13 : i32
    scf.if %22 {
      %26 = tpu.iota {dimensions = array<i32: 0>} : vector<32x128xi32>
      %27 = tpu.iota {dimensions = array<i32: 1>} : vector<32x128xi32>
      %c128_i32 = arith.constant 128 : i32
      %28 = vector.broadcast %c128_i32 : i32 to vector<32x128xi32>
      %29 = arith.muli %26, %28 : vector<32x128xi32>
      %c0_i32_16 = arith.constant 0 : i32
      %30 = vector.broadcast %c0_i32_16 : i32 to vector<32x128xi32>
      %31 = arith.addi %30, %29 : vector<32x128xi32>
      %32 = arith.addi %31, %27 : vector<32x128xi32>
      %c256_i32 = arith.constant 256 : i32
      %33 = vector.broadcast %c256_i32 : i32 to vector<32x128xi32>
      %34 = arith.cmpi slt, %32, %33 : vector<32x128xi32>
      %cst_17 = arith.constant 0.000000e+00 : f32
      %35 = vector.broadcast %cst_17 : f32 to vector<32x128xf32>
      %36 = arith.select %34, %12, %35 : vector<32x128xi1>, vector<32x128xf32>
      %cst_18 = arith.constant 0.000000e+00 : f32
      %37 = vector.broadcast %cst_18 : f32 to vector<32x128xf32>
      %38 = arith.select %34, %16, %37 : vector<32x128xi1>, vector<32x128xf32>
      %c0_19 = arith.constant 0 : index
      %c0_20 = arith.constant 0 : index
      %c0_21 = arith.constant 0 : index
      %39 = vector.load %arg5[%c0_19, %c0_20, %c0_21] : memref<3x8x128xf32, #tpu.memory_space<vmem>>, vector<1x8x128xf32>
      %40 = vector.shape_cast %39 : vector<1x8x128xf32> to vector<8x128xf32>
      %41 = arith.mulf %36, %38 : vector<32x128xf32>
      %42 = vector.shape_cast %41 : vector<32x128xf32> to vector<4x8x128xf32>
      %cst_22 = arith.constant dense<0.000000e+00> : vector<8x128xf32>
      %43 = vector.multi_reduction <add>, %42, %cst_22 [0] : vector<4x8x128xf32> to vector<8x128xf32>
      %44 = arith.addf %40, %43 : vector<8x128xf32>
      %c0_23 = arith.constant 0 : index
      %c0_24 = arith.constant 0 : index
      %c0_25 = arith.constant 0 : index
      %45 = vector.load %arg5[%c0_23, %c0_24, %c0_25] : memref<3x8x128xf32, #tpu.memory_space<vmem>>, vector<1x8x128xf32>
      %46 = vector.shape_cast %45 : vector<1x8x128xf32> to vector<8x128xf32>
      %47 = vector.shape_cast %44 : vector<8x128xf32> to vector<1x8x128xf32>
      tpu.vector_store %arg5[%c0_23, %c0_24, %c0_25], %47 {strides = array<i32>} : memref<3x8x128xf32, #tpu.memory_space<vmem>>, vector<1x8x128xf32>,
      %c1_26 = arith.constant 1 : index
      %c0_27 = arith.constant 0 : index
      %c0_28 = arith.constant 0 : index
      %48 = vector.load %arg5[%c1_26, %c0_27, %c0_28] : memref<3x8x128xf32, #tpu.memory_space<vmem>>, vector<1x8x128xf32>
      %49 = vector.shape_cast %48 : vector<1x8x128xf32> to vector<8x128xf32>
      %50 = vector.shape_cast %36 : vector<32x128xf32> to vector<4x8x128xf32>
      %cst_29 = arith.constant dense<0.000000e+00> : vector<8x128xf32>
      %51 = vector.multi_reduction <add>, %50, %cst_29 [0] : vector<4x8x128xf32> to vector<8x128xf32>
      %52 = arith.addf %49, %51 : vector<8x128xf32>
      %c1_30 = arith.constant 1 : index
      %c0_31 = arith.constant 0 : index
      %c0_32 = arith.constant 0 : index
      %53 = vector.load %arg5[%c1_30, %c0_31, %c0_32] : memref<3x8x128xf32, #tpu.memory_space<vmem>>, vector<1x8x128xf32>
      %54 = vector.shape_cast %53 : vector<1x8x128xf32> to vector<8x128xf32>
      %55 = vector.shape_cast %52 : vector<8x128xf32> to vector<1x8x128xf32>
      tpu.vector_store %arg5[%c1_30, %c0_31, %c0_32], %55 {strides = array<i32>} : memref<3x8x128xf32, #tpu.memory_space<vmem>>, vector<1x8x128xf32>,
      %c2 = arith.constant 2 : index
      %c0_33 = arith.constant 0 : index
      %c0_34 = arith.constant 0 : index
      %56 = vector.load %arg5[%c2, %c0_33, %c0_34] : memref<3x8x128xf32, #tpu.memory_space<vmem>>, vector<1x8x128xf32>
      %57 = vector.shape_cast %56 : vector<1x8x128xf32> to vector<8x128xf32>
      %58 = vector.shape_cast %38 : vector<32x128xf32> to vector<4x8x128xf32>
      %cst_35 = arith.constant dense<0.000000e+00> : vector<8x128xf32>
      %59 = vector.multi_reduction <add>, %58, %cst_35 [0] : vector<4x8x128xf32> to vector<8x128xf32>
      %60 = arith.addf %57, %59 : vector<8x128xf32>
      %c2_36 = arith.constant 2 : index
      %c0_37 = arith.constant 0 : index
      %c0_38 = arith.constant 0 : index
      %61 = vector.load %arg5[%c2_36, %c0_37, %c0_38] : memref<3x8x128xf32, #tpu.memory_space<vmem>>, vector<1x8x128xf32>
      %62 = vector.shape_cast %61 : vector<1x8x128xf32> to vector<8x128xf32>
      %63 = vector.shape_cast %60 : vector<8x128xf32> to vector<1x8x128xf32>
      tpu.vector_store %arg5[%c2_36, %c0_37, %c0_38], %63 {strides = array<i32>} : memref<3x8x128xf32, #tpu.memory_space<vmem>>, vector<1x8x128xf32>,
    } else {
    }
    %c0_i32_14 = arith.constant 0 : i32
    %23 = arith.cmpi eq, %arg1, %c0_i32_14 : i32
    %24 = arith.extui %23 : i1 to i32
    %c0_i32_15 = arith.constant 0 : i32
    %25 = arith.cmpi ne, %24, %c0_i32_15 : i32
    scf.if %25 {
      %c0_16 = arith.constant 0 : index
      %c0_17 = arith.constant 0 : index
      %c0_18 = arith.constant 0 : index
      %26 = vector.load %arg5[%c0_16, %c0_17, %c0_18] : memref<3x8x128xf32, #tpu.memory_space<vmem>>, vector<1x8x128xf32>
      %27 = vector.shape_cast %26 : vector<1x8x128xf32> to vector<8x128xf32>
      %28 = vector.shape_cast %27 : vector<8x128xf32> to vector<1x8x128xf32>
      %cst_19 = arith.constant dense<0.000000e+00> : vector<1xf32>
      %29 = vector.multi_reduction <add>, %28, %cst_19 [1, 2] : vector<1x8x128xf32> to vector<1xf32>
      %30 = vector.shape_cast %29 : vector<1xf32> to vector<1x1x1xf32>
      %31 = vector.extract %30[0, 0, 0] : f32 from vector<1x1x1xf32>
      %c1_20 = arith.constant 1 : index
      %c0_21 = arith.constant 0 : index
      %c0_22 = arith.constant 0 : index
      %32 = vector.load %arg5[%c1_20, %c0_21, %c0_22] : memref<3x8x128xf32, #tpu.memory_space<vmem>>, vector<1x8x128xf32>
      %33 = vector.shape_cast %32 : vector<1x8x128xf32> to vector<8x128xf32>
      %34 = vector.shape_cast %33 : vector<8x128xf32> to vector<1x8x128xf32>
      %cst_23 = arith.constant dense<0.000000e+00> : vector<1xf32>
      %35 = vector.multi_reduction <add>, %34, %cst_23 [1, 2] : vector<1x8x128xf32> to vector<1xf32>
      %36 = vector.shape_cast %35 : vector<1xf32> to vector<1x1x1xf32>
      %37 = vector.extract %36[0, 0, 0] : f32 from vector<1x1x1xf32>
      %c2 = arith.constant 2 : index
      %c0_24 = arith.constant 0 : index
      %c0_25 = arith.constant 0 : index
      %38 = vector.load %arg5[%c2, %c0_24, %c0_25] : memref<3x8x128xf32, #tpu.memory_space<vmem>>, vector<1x8x128xf32>
      %39 = vector.shape_cast %38 : vector<1x8x128xf32> to vector<8x128xf32>
      %40 = vector.shape_cast %39 : vector<8x128xf32> to vector<1x8x128xf32>
      %cst_26 = arith.constant dense<0.000000e+00> : vector<1xf32>
      %41 = vector.multi_reduction <add>, %40, %cst_26 [1, 2] : vector<1x8x128xf32> to vector<1xf32>
      %42 = vector.shape_cast %41 : vector<1xf32> to vector<1x1x1xf32>
      %43 = vector.extract %42[0, 0, 0] : f32 from vector<1x1x1xf32>
      %cst_27 = arith.constant 1.000000e+00 : f32
      %44 = arith.addf %31, %cst_27 : f32
      %cst_28 = arith.constant 2.000000e+00 : f32
      %45 = arith.mulf %cst_28, %44 : f32
      %46 = arith.addf %37, %43 : f32
      %cst_29 = arith.constant 1.000000e+00 : f32
      %47 = arith.addf %46, %cst_29 : f32
      %48 = arith.divf %45, %47 : f32
      %49 = vector.broadcast %48 : f32 to vector<1x8x128xf32>
      %c0_30 = arith.constant 0 : index
      %c0_31 = arith.constant 0 : index
      %c0_32 = arith.constant 0 : index
      %50 = vector.load %arg4[%c0_30, %c0_31, %c0_32] : memref<1x8x128xf32, #tpu.memory_space<vmem>>, vector<1x8x128xf32>
      tpu.vector_store %arg4[%c0_30, %c0_31, %c0_32], %49 {strides = array<i32>} : memref<1x8x128xf32, #tpu.memory_space<vmem>>, vector<1x8x128xf32>,
    } else {
    }
    return
  }
  func.func @transform_0(%arg0: i32, %arg1: i32) -> (i32, i32, i32, i32) {
    %c0_i32 = arith.constant 0 : i32
    %c0_i32_0 = arith.constant 0 : i32
    %c0_i32_1 = arith.constant 0 : i32
    return %arg0, %c0_i32, %arg1, %c0_i32_0 : i32, i32, i32, i32
  }
  func.func @transform_1(%arg0: i32, %arg1: i32) -> (i32, i32, i32) {
    %c0_i32 = arith.constant 0 : i32
    %c0_i32_0 = arith.constant 0 : i32
    return %arg0, %arg1, %c0_i32 : i32, i32, i32
  }
  func.func @transform_2(%arg0: i32, %arg1: i32) -> (i32, i32, i32) {
    %c0_i32 = arith.constant 0 : i32
    %c0_i32_0 = arith.constant 0 : i32
    %c0_i32_1 = arith.constant 0 : i32
    return %arg0, %c0_i32, %c0_i32_0 : i32, i32, i32
  }
}

</mosaic_0001>

<llo_original>
// kernel: tpu_custom_call.1
$region0: #{tpu_custom_call.1}
  #allocation0 [shape = 'u32[]', space=smem, size = 0x4, offset = 0x4, fixed_abs, tag = 'smem constant byte address 0x4 - core index']
  #allocation1 [shape = 'u32[144,128]{1,0:T(1,128)}', space=vmem, size = 0x12000, scoped, tag = 'internal scratch']
  #allocation2 [shape = 'f32[3,8,128]{2,1,0:T(8,128)}', space=vmem, size = 0x3000, scoped, tag = 'scratch operand']
  #allocation9 [shape = 's32[]', space=sflag, size = 0x4, offset = 0, fixed_abs, tag = 'sflag constant byte address 0x0 - dummy sync flag']
  %s0 = inlined_call_operand.hbm [shape: f32[2,2,2,128], index: 0, kind: input, shape index: {}]
  %s1 = inlined_call_operand.hbm [shape: u8[2,2,128], index: 1, kind: input, shape index: {}]
  %s2 = inlined_call_operand.hbm [shape: f32[2,8,128], index: 2, kind: output, shape index: {}]
  %s3 = sld [smem:[#allocation0]]
  $region61: #{tpu_custom_call.1} parent=0
    _
  %s5 = ssub.s32 1, %s3
  %s6 = scalar_select 0, %s5, %s3
  $region1: #{tpu_custom_call.1} parent=0
    #allocation3 [shape = 'u8[65536]{0}', space=vmem, size = 0x10000, scoped, tag = 'input window, operand 0']
    #allocation4 [shape = 's32[2]{0}', space=sflag, size = 0x8, scoped, tag = 'scoped memory for tpu_custom_call.1']
    #allocation5 [shape = 's32[2]{0}', space=sflag, size = 0x8, scoped, tag = 'scoped memory for tpu_custom_call.1']
    #allocation6 [shape = 'u8[8192]{0}', space=vmem, size = 0x2000, scoped, tag = 'input window, operand 1']
    #allocation7 [shape = 's32[2]{0}', space=sflag, size = 0x8, scoped, tag = 'scoped memory for tpu_custom_call.1']
    #allocation8 [shape = 'u8[8192]{0}', space=vmem, size = 0x2000, scoped, tag = 'output window, operand 0']
    %7 = vsyncpa [#allocation4], 0
    %s8 = scalar_lea.sflag [#allocation4], 1
    %9 = vsyncpa %s8, 0
    %10 = vsyncpa [#allocation7], 0
    %s11 = scalar_lea.sflag [#allocation7], 1
    %12 = vsyncpa %s11, 0
    %13 = vsyncpa [#allocation5], 0
    %s14 = scalar_lea.sflag [#allocation5], 1
    %15 = vsyncpa %s14, 0
    loop: start=0, step=1, limit=4
    $region2: #{tpu_custom_call.1} parent=1 // loop_pre_header
      _
    $region3: #{tpu_custom_call.1} parent=1 // loop_header
      %s17 = sphi 0, %s21
      %p18 = scmp.ge.s32.totalorder %s17, 4
      %s24 = sphi 0, %s36
      %s25 = sphi 0, %s32
      %s26 = sphi 0, %s24
      %s27 = sphi 0, %s25
      %s28 = sphi 0, %s26
      %s29 = sphi 0, %s27
      %s41 = sphi 0, %s43
      %s44 = sphi 0, %s41
      %s45 = sphi 0, %s44
      %s61 = sphi 0, %s45
      %s69 = sphi 0, %s71
      %s72 = sphi 0, %s69
      %s73 = sphi 0, %s72
      %s89 = sphi 0, %s73
      %s95 = sphi 0, %s97
      %s98 = sphi 0, %s95
      %s99 = sphi 0, %s98
      %s115 = sphi 0, %s99
    $region4: #{tpu_custom_call.1} parent=1 // loop_header_branch
      %20 = sbr.rel (%p18) target = $region8
    $region5: #{tpu_custom_call.1} parent=1 // loop_body
      %s22 = ssub.s32 %s17, 1
      %s23 = ssub.s32 %s17, 2
      %s30 = sadd.s32 1, %s25
      %p31 = scmp.ge.s32.totalorder %s30, 1
      %s32 = scalar_select %p31, 0, %s30
      %s33 = sadd.s32 1, %s24
      %s34 = scalar_select %p31, %s33, %s24
      %p35 = scmp.ge.s32.totalorder %s34, 2
      %s36 = scalar_select %p35, 0, %s34
      %s37 = ssub.s32 %s24, %s36
      %s38 = ssub.s32 %s25, %s32
      %s39 = sor.u32 %s37, %s38
      %p40 = scmp.eq.s32.totalorder %s39, 0
      %s42 = sadd.s32 %s41, 1
      %s43 = scalar_select %p40, %s41, %s42
      %p46 = pneg %p40
      %p47 = scmp.eq.s32.totalorder %s17, 1
      %p48 = por %p46, %p47
      %p49 = scmp.ne.s32.totalorder %s41, %s44
      %p50 = scmp.eq.s32.totalorder %s17, 0
      %p51 = por %p49, %p50
      %p52 = scmp.ne.s32.totalorder %s41, %s44
      %p53 = scmp.eq.s32.totalorder %s22, 1
      %p54 = por %p52, %p53
      %p55 = scmp.ne.s32.totalorder %s44, %s45
      %p56 = scmp.eq.s32.totalorder %s22, 0
      %p57 = por %p55, %p56
      %p58 = scmp.ne.s32.totalorder %s44, %s45
      %p59 = scmp.eq.s32.totalorder %s23, 1
      %p60 = por %p58, %p59
      %p62 = scmp.ne.s32.totalorder %s45, %s61
      %p63 = scmp.eq.s32.totalorder %s23, 0
      %p64 = por %p62, %p63
      %s65 = ssub.s32 %s24, %s36
      %s66 = ssub.s32 %s25, %s32
      %s67 = sor.u32 %s65, %s66
      %p68 = scmp.eq.s32.totalorder %s67, 0
      %s70 = sadd.s32 %s69, 1
      %s71 = scalar_select %p68, %s69, %s70
      %p74 = pneg %p68
      %p75 = scmp.eq.s32.totalorder %s17, 1
      %p76 = por %p74, %p75
      %p77 = scmp.ne.s32.totalorder %s69, %s72
      %p78 = scmp.eq.s32.totalorder %s17, 0
      %p79 = por %p77, %p78
      %p80 = scmp.ne.s32.totalorder %s69, %s72
      %p81 = scmp.eq.s32.totalorder %s22, 1
      %p82 = por %p80, %p81
      %p83 = scmp.ne.s32.totalorder %s72, %s73
      %p84 = scmp.eq.s32.totalorder %s22, 0
      %p85 = por %p83, %p84
      %p86 = scmp.ne.s32.totalorder %s72, %s73
      %p87 = scmp.eq.s32.totalorder %s23, 1
      %p88 = por %p86, %p87
      %p90 = scmp.ne.s32.totalorder %s73, %s89
      %p91 = scmp.eq.s32.totalorder %s23, 0
      %p92 = por %p90, %p91
      %s93 = ssub.s32 %s24, %s36
      %p94 = scmp.eq.s32.totalorder %s93, 0
      %s96 = sadd.s32 %s95, 1
      %s97 = scalar_select %p94, %s95, %s96
      %p100 = pneg %p94
      %p101 = scmp.eq.s32.totalorder %s17, 1
      %p102 = por %p100, %p101
      %p103 = scmp.ne.s32.totalorder %s95, %s98
      %p104 = scmp.eq.s32.totalorder %s17, 0
      %p105 = por %p103, %p104
      %p106 = scmp.ne.s32.totalorder %s95, %s98
      %p107 = scmp.eq.s32.totalorder %s22, 1
      %p108 = por %p106, %p107
      %p109 = scmp.ne.s32.totalorder %s98, %s99
      %p110 = scmp.eq.s32.totalorder %s22, 0
      %p111 = por %p109, %p110
      %p112 = scmp.ne.s32.totalorder %s98, %s99
      %p113 = scmp.eq.s32.totalorder %s23, 1
      %p114 = por %p112, %p113
      %p116 = scmp.ne.s32.totalorder %s99, %s115
      %p117 = scmp.eq.s32.totalorder %s23, 0
      %p118 = por %p116, %p117
      %p119 = scmp.le.s32.totalorder 1, %s17
      %p120 = scmp.lt.s32.totalorder %s17, 3
      %p121 = pnand %p119, %p120
      %p122 = pneg %p121
      // Predicated region
      $region9: #{tpu_custom_call.1} parent=5 // pred_check
        _
      $region10: #{tpu_custom_call.1} parent=5 // pred_check_branch
        %124 = sbr.rel (%p121) target = $region12
      $region11: #{tpu_custom_call.1} parent=5 // pred_region
        %s125 = ssub.s32 %s17, 1
      $region12: #{tpu_custom_call.1} parent=5 // pred_fallthru
        _
      %p126 = scmp.lt.s32.totalorder %s17, 2
      // Predicated region
      $region13: #{tpu_custom_call.1} parent=5 // pred_check
        %p127 = pneg %p126
      $region14: #{tpu_custom_call.1} parent=5 // pred_check_branch
        %129 = sbr.rel (%p127) target = $region16
      $region15: #{tpu_custom_call.1} parent=5 // pred_region
        // Predicated region
        $region17: #{tpu_custom_call.1} parent=15 // pred_check
          %p130 = pneg %p51
        $region18: #{tpu_custom_call.1} parent=15 // pred_check_branch
          %132 = sbr.rel (%p130) target = $region20
        $region19: #{tpu_custom_call.1} parent=15 // pred_region
          #allocation10 [shape = 'u32[6]{0}', space=smem, size = 0x18, scoped, tag = 'DMA stride descriptor']
          %s133 = sand.u32 %s41, 1
          %s134 = scalar_lea.sflag [#allocation4], %s133
          %s135 = sand.u32 %s41, 1
          %s136 = smul.addr %s135, 64
          %s137 = scalar_lea.vmem [#allocation3], %s136
          %s138 = smul.u32 16, %s25
          %s139 = ssub.s32 1, %s138
          %s140 = smul.u32 64, %s139
          %s142 = ssub.s32 1024, %s140
          %143 = vsyncadd %s134, %s142
          %p144 = scmp.ne.s32.totalorder 0, %s140
          %s145 = smul.addr %s24, 2
          %s146 = sadd.s32 %s138, %s145
          %s147 = smul.addr %s146, 32
          %s148 = scalar_lea.hbm %s0, %s147
          %s149 = smul.u32 2, %s139
          %s150 = smul.u32 %s149, 2
          %s152 = sshll.u32 1, 14
          %s153 = sxor.u32 4294967295, %s152
          %s155 = sld [smem:[#allocation0]]
          %s156 = sadd.s32 2, %s155
          %s158 = sshll.u32 7, 26
          %s159 = sxor.u32 4294967295, %s158
          %s160 = sand.u32 0, %s159
          %s161 = sshll.u32 %s156, 26
          %s162 = sor.u32 %s160, %s161
          %s163 = sshll.u32 %s137, 4
          %s164 = int_to_ptr.vmem [resolvable:$true] %s163
          %s165 = sshll.u32 %s150, 4
          %170 = sst [smem:[#allocation10]] 32
          %s171 = scalar_lea.smem [#allocation10], 1
          %172 = sst [smem:[%s171]] 512
          %s173 = scalar_lea.smem [#allocation10], 2
          %174 = sst [smem:[%s173]] %s139
          %s175 = scalar_lea.smem [#allocation10], 3
          %176 = sst [smem:[%s175]] 32
          %s177 = scalar_lea.smem [#allocation10], 4
          %178 = sst [smem:[%s177]] 32
          %s179 = scalar_lea.smem [#allocation10], 5
          %180 = sst [smem:[%s179]] 2
          %182 = dma.general (%p144), %s148, %s165, %s164, %s134, 131072, [#allocation10], %s162, 0
        $region20: #{tpu_custom_call.1} parent=15 // pred_fallthru
          _
        // Predicated region
        $region21: #{tpu_custom_call.1} parent=15 // pred_check
          %p183 = pneg %p79
        $region22: #{tpu_custom_call.1} parent=15 // pred_check_branch
          %185 = sbr.rel (%p183) target = $region24
        $region23: #{tpu_custom_call.1} parent=15 // pred_region
          %s186 = sand.u32 %s69, 1
          %s187 = scalar_lea.sflag [#allocation7], %s186
          %s188 = sand.u32 %s69, 1
          %s189 = smul.addr %s188, 8
          %s190 = scalar_lea.vmem [#allocation6], %s189
          %s191 = smul.u32 8, %s25
          %s192 = ssub.s32 1, %s191
          %s193 = smul.u32 16, %s192
          %s195 = ssub.s32 128, %s193
          %196 = vsyncadd %s187, %s195
          %p197 = scmp.ne.s32.totalorder 0, %s193
          %s198 = sadd.s32 %s191, %s24
          %s199 = smul.addr %s198, 16
          %s200 = scalar_lea.hbm %s1, %s199
          %s201 = sshll.u32 %s190, 4
          %s202 = int_to_ptr.vmem [resolvable:$true] %s201
          %s203 = sshll.u32 %s192, 4
          %207 = dma.hbm_to_vmem [thread:$0]  (%p197), %s200, %s203, %s202, %s187, 16, 16, 1
        $region24: #{tpu_custom_call.1} parent=15 // pred_fallthru
          _
      $region16: #{tpu_custom_call.1} parent=5 // pred_fallthru
        _
      %p208 = scmp.le.s32.totalorder 1, %s17
      %p209 = scmp.lt.s32.totalorder %s17, 3
      %p210 = pnand %p208, %p209
      %p211 = pneg %p210
      // Predicated region
      $region25: #{tpu_custom_call.1} parent=5 // pred_check
        _
      $region26: #{tpu_custom_call.1} parent=5 // pred_check_branch
        %213 = sbr.rel (%p210) target = $region28
      $region27: #{tpu_custom_call.1} parent=5 // pred_region
        %s214 = ssub.s32 %s17, 1
        %s215 = sand.u32 %s44, 1
        %s216 = scalar_lea.sflag [#allocation4], %s215
        %s217 = sand.u32 %s44, 1
        %s218 = smul.addr %s217, 64
        %s219 = scalar_lea.vmem [#allocation3], %s218
        // Predicated region
        $region29: #{tpu_custom_call.1} parent=27 // pred_check
          %p220 = pneg %p57
        $region30: #{tpu_custom_call.1} parent=27 // pred_check_branch
          %222 = sbr.rel (%p220) target = $region32
        $region31: #{tpu_custom_call.1} parent=27 // pred_region
          %223 = dma.done %s216, 1024
        $region32: #{tpu_custom_call.1} parent=27 // pred_fallthru
          _
        %s224 = sand.u32 %s72, 1
        %s225 = scalar_lea.sflag [#allocation7], %s224
        %s226 = sand.u32 %s72, 1
        %s227 = smul.addr %s226, 8
        %s228 = scalar_lea.vmem [#allocation6], %s227
        // Predicated region
        $region33: #{tpu_custom_call.1} parent=27 // pred_check
          %p229 = pneg %p85
        $region34: #{tpu_custom_call.1} parent=27 // pred_check_branch
          %231 = sbr.rel (%p229) target = $region36
        $region35: #{tpu_custom_call.1} parent=27 // pred_region
          %232 = dma.done %s225, 128
        $region36: #{tpu_custom_call.1} parent=27 // pred_fallthru
          _
        %s233 = sand.u32 %s44, 1
        %s234 = scalar_lea.sflag [#allocation4], %s233
        %s235 = sand.u32 %s44, 1
        %s236 = smul.addr %s235, 64
        %s237 = scalar_lea.vmem [#allocation3], %s236
        %p238 = pneg %p57
        %p239 = pneg %p54
        %s240 = sand.u32 %s72, 1
        %s241 = scalar_lea.sflag [#allocation7], %s240
        %s242 = sand.u32 %s72, 1
        %s243 = smul.addr %s242, 8
        %s244 = scalar_lea.vmem [#allocation6], %s243
        %p245 = pneg %p85
        %p246 = pneg %p82
        %p247 = pneg %p111
        %p248 = pneg %p108
        %s249 = sand.u32 %s98, 1
        %s250 = scalar_lea.sflag [#allocation5], %s249
        %s251 = sand.u32 %s98, 1
        %s252 = smul.addr %s251, 8
        %s253 = scalar_lea.vmem [#allocation8], %s252
        %s254 = smul.u32 16, %s27
        %s255 = ssub.s32 1, %s254
        %s256 = smul.u32 64, %s255
        %s257 = smul.u32 8, %s27
        %s258 = ssub.s32 1, %s257
        %s259 = smul.u32 16, %s258
        %p260 = scmp.eq.s32.totalorder %s27, 0
        // Predicated region
        $region37: #{tpu_custom_call.1} parent=27 // pred_check
          %p261 = pneg %p260
        $region38: #{tpu_custom_call.1} parent=27 // pred_check_branch
          %263 = sbr.rel (%p261) target = $region40
        $region39: #{tpu_custom_call.1} parent=27 // pred_region
          %264 = vst [vmem:[#allocation2] sm:$0xff] 0.0
          %265 = vst [vmem:[#allocation2 + $0x8] sm:$0xff] 0.0
          %266 = vst [vmem:[#allocation2 + $0x10] sm:$0xff] 0.0
        $region40: #{tpu_custom_call.1} parent=27 // pred_fallthru
          _
        %v267 = vld [vmem:[%s219] sm:$0xff]
        %v268 = vld [vmem:[%s219 + $0x8] sm:$0xff]
        %v269 = vld [vmem:[%s219 + $0x10] sm:$0xff]
        %v270 = vld [vmem:[%s219 + $0x18] sm:$0xff]
        %s271 = scalar_lea.vmem %s219, 32 [#allocation3]
        %v272 = vld [vmem:[%s271] sm:$0xff]
        %v273 = vld [vmem:[%s271 + $0x8] sm:$0xff]
        %v274 = vld [vmem:[%s271 + $0x10] sm:$0xff]
        %v275 = vld [vmem:[%s271 + $0x18] sm:$0xff]
        %v276 = vsub.f32 %v272, %v267
        %v277 = vsub.f32 %v273, %v268
        %v278 = vsub.f32 %v274, %v269
        %v279 = vsub.f32 %v275, %v270
        %v280 = vxor.u32 %v276, 2147483648
        %v281 = vxor.u32 %v277, 2147483648
        %v282 = vxor.u32 %v278, 2147483648
        %v283 = vxor.u32 %v279, 2147483648
        %v284 = vmul.f32 %v280, 1.442695
        %v285 = vpow.pop %v284
        %v286 = vmul.f32 %v281, 1.442695
        %v287 = vpow.pop %v286
        %v288 = vmul.f32 %v282, 1.442695
        %v289 = vpow.pop %v288
        %v290 = vmul.f32 %v283, 1.442695
        %v291 = vpow.pop %v290
        %v292 = vadd.f32 %v285, 1.0
        %v293 = vadd.f32 %v287, 1.0
        %v294 = vadd.f32 %v289, 1.0
        %v295 = vadd.f32 %v291, 1.0
        %v296 = vrcp.pop %v292
        %v297 = vmul.f32 1.0, %v296
        %v298 = vrcp.pop %v293
        %v299 = vmul.f32 1.0, %v298
        %v300 = vrcp.pop %v294
        %v301 = vmul.f32 1.0, %v300
        %v302 = vrcp.pop %v295
        %v303 = vmul.f32 1.0, %v302
        %v304 = vld [vmem:[%s228] sm:$0x1]
        %v305 = vld [vmem:[%s228 + $0x1] sm:$0x1]
        %v306 = vld [vmem:[%s228 + $0x2] sm:$0x1]
        %v307 = vld [vmem:[%s228 + $0x3] sm:$0x1]
        %v308 = vld [vmem:[%s228 + $0x4] sm:$0x1]
        %v309 = vld [vmem:[%s228 + $0x5] sm:$0x1]
        %v310 = vld [vmem:[%s228 + $0x6] sm:$0x1]
        %v311 = vld [vmem:[%s228 + $0x7] sm:$0x1]
        %v312 = vunpack.c.0.s8 %v304
        %v313 = vunpack.c.0.s8 %v305
        %v314 = vunpack.c.0.s8 %v306
        %v315 = vunpack.c.0.s8 %v307
        %v316 = vunpack.c.0.s8 %v308
        %v317 = vunpack.c.0.s8 %v309
        %v318 = vunpack.c.0.s8 %v310
        %v319 = vunpack.c.0.s8 %v311
        %v320 = vand.u32 %v312, 255
        %v321 = vand.u32 %v313, 255
        %v322 = vand.u32 %v314, 255
        %v323 = vand.u32 %v315, 255
        %v324 = vand.u32 %v316, 255
        %v325 = vand.u32 %v317, 255
        %v326 = vand.u32 %v318, 255
        %v327 = vand.u32 %v319, 255
        %v328 = vcvt.s32.f32 %v320
        %v329 = vcvt.s32.f32 %v321
        %v330 = vcvt.s32.f32 %v322
        %v331 = vcvt.s32.f32 %v323
        %v332 = vcvt.s32.f32 %v324
        %v333 = vcvt.s32.f32 %v325
        %v334 = vcvt.s32.f32 %v326
        %v335 = vcvt.s32.f32 %v327
        %p336 = scmp.lt.s32.totalorder %s27, 0
        // Predicated region
        $region41: #{tpu_custom_call.1} parent=27 // pred_check
          %p337 = pneg %p336
        $region42: #{tpu_custom_call.1} parent=27 // pred_check_branch
          %339 = sbr.rel (%p337) target = $region44
        $region43: #{tpu_custom_call.1} parent=27 // pred_region
          %v340 = vld [vmem:[#allocation2] sm:$0xff]
          %v349 = vcombine.low %v328, %v329
          %v350 = vcombine.low %v330, %v331
          %v351 = vcombine.low %v332, %v333
          %v352 = vcombine.low %v334, %v335
          %v357 = vmul.f32 %v297, %v349
          %v358 = vmul.f32 %v299, %v350
          %v359 = vmul.f32 %v301, %v351
          %v360 = vmul.f32 %v303, %v352
          %v361 = vadd.f32 %v357, %v358
          %v362 = vadd.f32 %v361, %v359
          %v363 = vadd.f32 %v362, %v360
          %v364 = vadd.f32 %v340, %v363
          %365 = vst [vmem:[#allocation2] sm:$0xff] %v364
          %s366 = scalar_lea.vmem [#allocation2], 8
          %v367 = vld [vmem:[%s366] sm:$0xff]
          %v368 = vadd.f32 %v297, %v299
          %v369 = vadd.f32 %v368, %v301
          %v370 = vadd.f32 %v369, %v303
          %v371 = vadd.f32 %v367, %v370
          %372 = vst [vmem:[%s366] sm:$0xff] %v371
          %s373 = scalar_lea.vmem [#allocation2], 16
          %v374 = vld [vmem:[%s373] sm:$0xff]
          %v375 = vadd.f32 %v349, %v350
          %v376 = vadd.f32 %v375, %v351
          %v377 = vadd.f32 %v376, %v352
          %v378 = vadd.f32 %v374, %v377
          %379 = vst [vmem:[%s373] sm:$0xff] %v378
        $region44: #{tpu_custom_call.1} parent=27 // pred_fallthru
          _
        // Predicated region
        $region45: #{tpu_custom_call.1} parent=27 // pred_check
          %p380 = pneg %p260
        $region46: #{tpu_custom_call.1} parent=27 // pred_check_branch
          %382 = sbr.rel (%p380) target = $region48
        $region47: #{tpu_custom_call.1} parent=27 // pred_region
          %v383 = vlaneseq
          %v384 = vshrl.u32 %v383, 7
          %v385 = vadd.s32 %v384, 8
          %v386 = vadd.s32 %v384, 16
          %v387 = vadd.s32 %v384, 24
          %v388 = vlaneseq
          %v389 = vand.u32 %v388, 127
          %v390 = vmul.u32 %v384, 128
          %v391 = vmul.u32 %v385, 128
          %v392 = vmul.u32 %v386, 128
          %v393 = vmul.u32 %v387, 128
          %v394 = vadd.s32 %v390, %v389
          %v395 = vadd.s32 %v391, %v389
          %v396 = vadd.s32 %v392, %v389
          %v397 = vadd.s32 %v393, %v389
          %vm398 = vcmp.lt.s32.totalorder %v394, 256
          %vm399 = vcmp.lt.s32.totalorder %v395, 256
          %vm400 = vcmp.lt.s32.totalorder %v396, 256
          %vm401 = vcmp.lt.s32.totalorder %v397, 256
          %v402 = vsel %vm398, %v297, 0.0
          %v403 = vsel %vm399, %v299, 0.0
          %v404 = vsel %vm400, %v301, 0.0
          %v405 = vsel %vm401, %v303, 0.0
          %v414 = vcombine.low %v328, %v329
          %v415 = vcombine.low %v330, %v331
          %v416 = vcombine.low %v332, %v333
          %v417 = vcombine.low %v334, %v335
          %v422 = vsel %vm398, %v414, 0.0
          %v423 = vsel %vm399, %v415, 0.0
          %v424 = vsel %vm400, %v416, 0.0
          %v425 = vsel %vm401, %v417, 0.0
          %v426 = vld [vmem:[#allocation2] sm:$0xff]
          %v427 = vmul.f32 %v402, %v422
          %v428 = vmul.f32 %v403, %v423
          %v429 = vmul.f32 %v404, %v424
          %v430 = vmul.f32 %v405, %v425
          %v431 = vadd.f32 %v427, %v428
          %v432 = vadd.f32 %v431, %v429
          %v433 = vadd.f32 %v432, %v430
          %v434 = vadd.f32 %v426, %v433
          %435 = vst [vmem:[#allocation2] sm:$0xff] %v434
          %s436 = scalar_lea.vmem [#allocation2], 8
          %v437 = vld [vmem:[%s436] sm:$0xff]
          %v438 = vadd.f32 %v402, %v403
          %v439 = vadd.f32 %v438, %v404
          %v440 = vadd.f32 %v439, %v405
          %v441 = vadd.f32 %v437, %v440
          %442 = vst [vmem:[%s436] sm:$0xff] %v441
          %s443 = scalar_lea.vmem [#allocation2], 16
          %v444 = vld [vmem:[%s443] sm:$0xff]
          %v445 = vadd.f32 %v422, %v423
          %v446 = vadd.f32 %v445, %v424
          %v447 = vadd.f32 %v446, %v425
          %v448 = vadd.f32 %v444, %v447
          %449 = vst [vmem:[%s443] sm:$0xff] %v448
          %v450 = vld [vmem:[#allocation2] sm:$0xff]
          %451 = vadd.xlane.f32.xlu0 %v450
          %v452 = vpop.xlane.xlu0 %451
          %v453 = vrot.slane %v452, 4
          %v454 = vadd.f32 %v452, %v453
          %v455 = vrot.slane %v454, 2
          %v456 = vadd.f32 %v454, %v455
          %v457 = vrot.slane %v456, 1
          %v458 = vadd.f32 %v456, %v457
          %s459 = vtos %v458
          %v460 = vld [vmem:[%s436] sm:$0xff]
          %461 = vadd.xlane.f32.xlu0 %v460
          %v462 = vpop.xlane.xlu0 %461
          %v463 = vrot.slane %v462, 4
          %v464 = vadd.f32 %v462, %v463
          %v465 = vrot.slane %v464, 2
          %v466 = vadd.f32 %v464, %v465
          %v467 = vrot.slane %v466, 1
          %v468 = vadd.f32 %v466, %v467
          %s469 = vtos %v468
          %v470 = vld [vmem:[%s443] sm:$0xff]
          %471 = vadd.xlane.f32.xlu0 %v470
          %v472 = vpop.xlane.xlu0 %471
          %v473 = vrot.slane %v472, 4
          %v474 = vadd.f32 %v472, %v473
          %v475 = vrot.slane %v474, 2
          %v476 = vadd.f32 %v474, %v475
          %v477 = vrot.slane %v476, 1
          %v478 = vadd.f32 %v476, %v477
          %s479 = vtos %v478
          %s480 = sadd.f32 %s459, 1.0
          %s481 = smul.f32 %s480, 2.0
          %s482 = sadd.f32 %s469, %s479
          %s483 = sadd.f32 %s482, 1.0
          %v484 = vstv %s483
          %v485 = vrcp.pop %v484
          %s486 = vtos %v485
          %s487 = smul.f32 %s481, %s486
          %v488 = vstv %s487
          %489 = vst [vmem:[%s253] sm:$0xff] %v488
        $region48: #{tpu_custom_call.1} parent=27 // pred_fallthru
          _
        %s490 = sand.u32 %s98, 1
        %s491 = scalar_lea.sflag [#allocation5], %s490
        %s492 = sand.u32 %s98, 1
        %s493 = smul.addr %s492, 8
        %s494 = scalar_lea.vmem [#allocation8], %s493
        // Predicated region
        $region49: #{tpu_custom_call.1} parent=27 // pred_check
          %p495 = pneg %p108
        $region50: #{tpu_custom_call.1} parent=27 // pred_check_branch
          %497 = sbr.rel (%p495) target = $region52
        $region51: #{tpu_custom_call.1} parent=27 // pred_region
          %s499 = ssub.s32 128, 128
          %500 = vsyncadd %s491, %s499
          %s501 = smul.addr %s26, 128
          %s502 = scalar_lea.hbm %s2, %s501
          %s504 = sshll.u32 %s494, 4
          %s505 = int_to_ptr.vmem [resolvable:$true] %s504
          %507 = dma.vmem_to_hbm [thread:$0]  %s505, 128, %s502, %s491
        $region52: #{tpu_custom_call.1} parent=27 // pred_fallthru
          _
      $region28: #{tpu_custom_call.1} parent=5 // pred_fallthru
        _
      %p508 = scmp.le.s32.totalorder 2, %s17
      // Predicated region
      $region53: #{tpu_custom_call.1} parent=5 // pred_check
        %p509 = pneg %p508
      $region54: #{tpu_custom_call.1} parent=5 // pred_check_branch
        %511 = sbr.rel (%p509) target = $region56
      $region55: #{tpu_custom_call.1} parent=5 // pred_region
        %s512 = ssub.s32 %s17, 2
        // Predicated region
        $region57: #{tpu_custom_call.1} parent=55 // pred_check
          %p513 = pneg %p114
        $region58: #{tpu_custom_call.1} parent=55 // pred_check_branch
          %515 = sbr.rel (%p513) target = $region60
        $region59: #{tpu_custom_call.1} parent=55 // pred_region
          %s516 = sand.u32 %s99, 1
          %s517 = scalar_lea.sflag [#allocation5], %s516
          %s518 = sand.u32 %s99, 1
          %s519 = smul.addr %s518, 8
          %s520 = scalar_lea.vmem [#allocation8], %s519
          %521 = dma.done %s517, 128
        $region60: #{tpu_custom_call.1} parent=55 // pred_fallthru
          _
      $region56: #{tpu_custom_call.1} parent=5 // pred_fallthru
        _
    $region6: #{tpu_custom_call.1} parent=1 // loop_footer
      %s21 = sadd.s32 1, %s17
    $region7: #{tpu_custom_call.1} parent=1 // loop_footer_branch
      %16 = sbr.rel target = $region3
    $region8: #{tpu_custom_call.1} parent=1 // loop_exit
      _
    %522 = vsyncpa [#allocation4], 1
    %s523 = scalar_lea.sflag [#allocation4], 1
    %524 = vsyncpa %s523, 1
    %525 = vsyncpa [#allocation7], 1
    %s526 = scalar_lea.sflag [#allocation7], 1
    %527 = vsyncpa %s526, 1
    %528 = vsyncpa [#allocation5], 1
    %s529 = scalar_lea.sflag [#allocation5], 1
    %530 = vsyncpa %s529, 1

</llo_original>
